<compile_context>
chip_gen: v6e
topology: v6e:2x2x1
jax: 0.10.0
libtpu: 0.0.40
codegen_flags: <defaults>
</compile_context>

<pallas_src>
import jax
import jax.numpy as jnp
from jax import lax
from jax.experimental import pallas as pl
from jax.experimental.pallas import tpu as pltpu


# ----------------------------------------------------------------------------
# Kernel 1: spectral-norm power iteration -> (u_new, sigma)
# ----------------------------------------------------------------------------
def _spectral_norm_kernel(w_ref, u_ref, u_out_ref, sigma_ref):
    eps = jnp.float32(1e-12)                      # F.normalize default eps
    w = w_ref[...].astype(jnp.float32)            # [C_out, K]
    u = u_ref[...].astype(jnp.float32)            # [1, C_out]

    # v = normalize(W^T u): u [1,C_out] @ W [C_out,K]  (no transpose needed)
    v = jnp.dot(u, w, preferred_element_type=jnp.float32)             # [1, K]
    v = v / jnp.maximum(jnp.sqrt(jnp.sum(v * v)), eps)

    # wv = W v: contract K axis of v against K axis of W (no w.T in VMEM)
    wv = lax.dot_general(v, w, (((1,), (1,)), ((), ())),
                         preferred_element_type=jnp.float32)          # [1, C_out]
    u_new = wv / jnp.maximum(jnp.sqrt(jnp.sum(wv * wv)), eps)

    # sigma = dot(u_new, W v)   (unguarded sigma==0, matches PyTorch)
    sigma = jnp.sum(u_new * wv)

    u_out_ref[...] = u_new.astype(u_out_ref.dtype)
    sigma_ref[0] = sigma


def spectral_power_iteration(w2d, u):
    """w2d: [C_out, K], u: [C_out]  ->  (u_new [C_out], sigma [1] f32)."""
    c_out, _ = w2d.shape
    u_row = u.reshape(1, c_out)
    # Whole W lives in VMEM; size the scoped limit explicitly (v7x default is
    # 32 MiB scoped / 64 MiB physical).
    # TODO(synk): tile over K with a partial-sum accumulator for layers where
    # W itself approaches the VMEM budget.
    w_bytes = w2d.size * w2d.dtype.itemsize
    vmem_bytes = int(max(32 << 20, min(2 * w_bytes + (8 << 20), 96 << 20)))
    u_new, sigma = pl.pallas_call(
        _spectral_norm_kernel,
        in_specs=[
            pl.BlockSpec(memory_space=pltpu.MemorySpace.VMEM),
            pl.BlockSpec(memory_space=pltpu.MemorySpace.VMEM),
        ],
        out_specs=(
            pl.BlockSpec(memory_space=pltpu.MemorySpace.VMEM),
            pl.BlockSpec(memory_space=pltpu.MemorySpace.SMEM),
        ),
        out_shape=(
            jax.ShapeDtypeStruct((1, c_out), u.dtype),
            jax.ShapeDtypeStruct((1,), jnp.float32),
        ),
        compiler_params=pltpu.CompilerParams(vmem_limit_bytes=vmem_bytes),
    )(w2d, u_row)
    return u_new.reshape(c_out), sigma


# ----------------------------------------------------------------------------
# Kernel 2: direct 3x3 conv as 9 per-tap matmuls (no im2col)
#
#   flat output position m = r*Wp + c  (Wp = W+2; columns c >= W are junk and
#   sliced off in the wrapper).  For tap (i, j):
#       xp[n, ci, r+i, c+j] == xflat[n, ci, m + i*Wp + j]
#   so each tap is a constant-offset contiguous window of the per-tile slab.
#   out[co, m] = (sum_{a} wt[a, co, :] @ slab[:, off_a + m]) / sigma + b[co]
# ----------------------------------------------------------------------------
def conv3x3_tapsum(slabs, wt, b_col, sigma, *, wp, kh, kw, tile_hw, hw_pad,
                   out_dtype):
    """slabs: [N, T, C_in, SLAB] bf16, wt: [kh*kw, C_out, C_in] bf16,
       b_col: [C_out, 1] f32, sigma: [1] f32  ->  y_flat [N, C_out, hw_pad]."""
    n, t_blocks, c_in, slab_len = slabs.shape
    n_taps, c_out, _ = wt.shape
    assert n_taps == kh * kw
    assert tile_hw % 128 == 0 and t_blocks * tile_hw == hw_pad
    assert slab_len == tile_hw + (kh - 1) * wp + (kw - 1)

    def kernel(slab_ref, wt_ref, b_ref, sigma_ref, o_ref):
        inv_sigma = 1.0 / sigma_ref[0]            # SMEM scalar
        acc = None
        for a in range(n_taps):                   # 9 taps, static unroll
            i, j = divmod(a, kw)
            off = i * wp + j                      # constant lane offset
            win = slab_ref[:, off:off + tile_hw]  # bf16 [C_in, TILE]
            part = jnp.dot(wt_ref[a], win,        # [C_out,C_in]x[C_in,TILE]
                           preferred_element_type=jnp.float32)
            acc = part if acc is None else acc + part
        # f32 epilogue (scale by 1/sigma, add bias), lane-dense [C_out, TILE]
        o_ref[...] = (acc * inv_sigma + b_ref[...]).astype(o_ref.dtype)

    grid = (n * t_blocks,)                        # flattened, fully parallel

    # VMEM budget: double-buffered slab + output, resident weights/bias, acc
    # and one realigned tap window; clamp so small cases keep the default.
    vmem_bytes = (2 * c_in * slab_len * 2          # slab (bf16, 2 buffers)
                  + 2 * c_out * tile_hw * 4        # output (f32, 2 buffers)
                  + 2 * n_taps * c_out * c_in * 2  # tap weights (bf16)
                  + c_out * tile_hw * 4            # f32 accumulator
                  + 2 * c_in * tile_hw * 2         # tap-window temporaries
                  + (4 << 20))
    vmem_bytes = int(max(32 << 20, min(vmem_bytes, 96 << 20)))

    return pl.pallas_call(
        kernel,
        grid=grid,
        in_specs=[
            # activation slab: one (image, tile) block per grid step,
            # double-buffered DMA; last two dims are full -> always legal.
            pl.BlockSpec((None, None, c_in, slab_len),
                         lambda g: (g // t_blocks, g % t_blocks, 0, 0)),
            # per-tap weights + bias: tiny, resident (same block every step)
            pl.BlockSpec((n_taps, c_out, c_in), lambda g: (0, 0, 0)),
            pl.BlockSpec((c_out, 1), lambda g: (0, 0)),
            # sigma scalar in SMEM (no HBM round-trip on W between kernels)
            pl.BlockSpec(memory_space=pltpu.MemorySpace.SMEM),
        ],
        # keep [C_out, TILE]: lane dim is a >=128 multiple -> unmasked stores
        out_specs=pl.BlockSpec((None, c_out, tile_hw),
                               lambda g: (g // t_blocks, 0, g % t_blocks)),
        out_shape=jax.ShapeDtypeStruct((n, c_out, hw_pad), out_dtype),
        compiler_params=pltpu.CompilerParams(
            dimension_semantics=("parallel",),
            vmem_limit_bytes=vmem_bytes,
        ),
    )(slabs, wt, b_col, sigma)


# ----------------------------------------------------------------------------
# Glue: padded/flattened slab layout and the full SpectralNorm(Conv2d).forward
# ----------------------------------------------------------------------------
def spectral_norm_conv_forward(x, w, b, u, tile_hw=None):
    """SpectralNorm(Conv2d(C_in, C_out, 3, padding=1)).forward(x).

    x: [N, C_in, H, W] (NCHW), w: [C_out, C_in, 3, 3], b: [C_out], u: [C_out]
    Returns (y [N, C_out, H, W], w_normalized, u_new)."""
    c_out, c_in, kh, kw = w.shape
    assert (kh, kw) == (3, 3), "this kernel is specialized for 3x3, pad=1"
    n, _, h, w_sp = x.shape
    k = c_in * kh * kw
    w2d = w.reshape(c_out, k)

    # --- power iteration (Pallas kernel 1): u_new + sigma scalar ---
    u_new, sigma = spectral_power_iteration(w2d, u)
    # weight.data update (returned for parity with the PyTorch side effect);
    # the conv consumes the ORIGINAL taps + 1/sigma, so no serialization on W.
    w_norm = (w / sigma).astype(w.dtype)

    # --- conv forward (Pallas kernel 2), no im2col ---
    wp = w_sp + 2                                  # padded row stride
    hw = h * wp                                    # flat output positions (incl junk cols)
    if tile_hw is None:
        # >=512-wide tiles (1024 cap); never tied to a single image's H*W.
        tile_hw = min(1024, pl.cdiv(max(hw, 512), 128) * 128)
    assert tile_hw % 128 == 0
    hw_pad = pl.cdiv(hw, tile_hw) * tile_hw
    t_blocks = hw_pad // tile_hw
    halo = (kh - 1) * wp + (kw - 1)                # 2*Wp + 2
    slab_len = tile_hw + halo
    len_in = hw_pad + halo

    # zero-pad spatially, flatten rows with stride Wp, pad the tail, then cut
    # per-tile slabs (each with its halo) — ~7% duplication instead of the 9x
    # im2col inflation; XLA fuses the pad/slice/stack/cast into copy passes.
    xp = jnp.pad(x, ((0, 0), (0, 0), (1, 1), (1, 1)))          # [N,C,H+2,Wp]
    xflat = xp.reshape(n, c_in, (h + 2) * wp)
    xflat = jnp.pad(xflat, ((0, 0), (0, 0), (0, len_in - (h + 2) * wp)))
    slabs = jnp.stack(
        [xflat[:, :, t * tile_hw: t * tile_hw + slab_len] for t in range(t_blocks)],
        axis=1).astype(jnp.bfloat16)                           # [N,T,C,SLAB]

    # per-tap weight matrices [9, C_out, C_in] (bf16 MXU operands)
    wt = jnp.transpose(w, (2, 3, 0, 1)).reshape(kh * kw, c_out, c_in)
    wt = wt.astype(jnp.bfloat16)
    b_col = b.reshape(c_out, 1).astype(jnp.float32)

    y_flat = conv3x3_tapsum(slabs, wt, b_col, sigma,
                            wp=wp, kh=kh, kw=kw, tile_hw=tile_hw,
                            hw_pad=hw_pad, out_dtype=x.dtype)  # [N,C_out,hw_pad]

    # drop padded tail + the 2 junk columns per row -> NCHW
    y = y_flat[:, :, :hw].reshape(n, c_out, h, wp)[:, :, :, :w_sp]
    return y, w_norm, u_new


if __name__ == "__main__":
    key = jax.random.PRNGKey(0)
    k_x, k_w, k_b, k_u = jax.random.split(key, 4)

    N, C_IN, H, W = 2, 4, 16, 16
    C_OUT, KH, KW = 8, 3, 3

    x = jax.random.normal(k_x, (N, C_IN, H, W), dtype=jnp.float32)
    w = jax.random.normal(k_w, (C_OUT, C_IN, KH, KW), dtype=jnp.float32) * 0.1
    b = jax.random.normal(k_b, (C_OUT,), dtype=jnp.float32) * 0.1
    # self.u is initialized as normalize(N(0,1) of size C_out) on first forward
    u0 = jax.random.normal(k_u, (C_OUT,), dtype=jnp.float32)
    u0 = u0 / jnp.maximum(jnp.linalg.norm(u0), 1e-12)

    # tile_hw=128 only to exercise the multi-tile flattened grid (6 steps) at
    # this toy size; production default is >=512.
    y, w_norm, u_new = spectral_norm_conv_forward(x, w, b, u0, tile_hw=128)
    jax.block_until_ready((y, w_norm, u_new))

    # Reference check in plain JAX (same math, XLA conv) — silent on success.
    w2d = w.reshape(C_OUT, -1)
    v = w2d.T @ u0
    v = v / jnp.maximum(jnp.linalg.norm(v), 1e-12)
    wv = w2d @ v
    u_ref = wv / jnp.maximum(jnp.linalg.norm(wv), 1e-12)
    sigma = jnp.dot(u_ref, wv)
    w_ref = w / sigma
    y_ref = jax.lax.conv_general_dilated(
        x, w_ref, window_strides=(1, 1), padding=((1, 1), (1, 1)),
        dimension_numbers=("NCHW", "OIHW", "NCHW")) + b.reshape(1, C_OUT, 1, 1)
    # conv operands are bf16 on the MXU (f32 accumulation) -> loose tolerance
    assert jnp.allclose(y, y_ref, rtol=5e-2, atol=5e-2)
    assert jnp.allclose(u_new, u_ref, rtol=1e-5, atol=1e-5)
    assert jnp.allclose(w_norm, w_ref, rtol=1e-5, atol=1e-5)

    print("KERNEL_OK")
</pallas_src>

<mosaic_0001>
module attributes {stable_mosaic.version = 11 : i64} {
  func.func @_spectral_norm_kernel(%arg0: memref<8x36xf32, #tpu.memory_space<vmem>>, %arg1: memref<1x8xf32, #tpu.memory_space<vmem>>, %arg2: memref<1x8xf32, #tpu.memory_space<vmem>>, %arg3: memref<1xf32, #tpu.memory_space<smem>>) attributes {dimension_semantics = [], scalar_prefetch = 0 : i64, scratch_operands = 0 : i64, tpu.core_type = #tpu.core_type<tc>} {
    %c0 = arith.constant 0 : index
    %c0_0 = arith.constant 0 : index
    %0 = vector.load %arg0[%c0, %c0_0] : memref<8x36xf32, #tpu.memory_space<vmem>>, vector<8x36xf32>
    %c0_1 = arith.constant 0 : index
    %c0_2 = arith.constant 0 : index
    %1 = vector.load %arg1[%c0_1, %c0_2] : memref<1x8xf32, #tpu.memory_space<vmem>>, vector<1x8xf32>
    %cst = arith.constant dense<0.000000e+00> : vector<1x36xf32>
    %2 = tpu.matmul %1, %0, %cst {dimension_numbers = #tpu.dot_dimension_numbers<[1], [0], [0], [1], [0, 0, 1, 1], [], []>} : vector<1x8xf32>, vector<8x36xf32>, vector<1x36xf32> -> vector<1x36xf32>
    %3 = arith.mulf %2, %2 : vector<1x36xf32>
    %4 = vector.shape_cast %3 : vector<1x36xf32> to vector<1x1x36xf32>
    %cst_3 = arith.constant dense<0.000000e+00> : vector<1xf32>
    %5 = vector.multi_reduction <add>, %4, %cst_3 [1, 2] : vector<1x1x36xf32> to vector<1xf32>
    %6 = vector.shape_cast %5 : vector<1xf32> to vector<1x1x1xf32>
    %7 = vector.extract %6[0, 0, 0] : f32 from vector<1x1x1xf32>
    %8 = math.sqrt %7 : f32
    %cst_4 = arith.constant 9.99999996E-13 : f32
    %9 = arith.maximumf %8, %cst_4 : f32
    %10 = vector.broadcast %9 : f32 to vector<1x36xf32>
    %11 = arith.divf %2, %10 : vector<1x36xf32>
    %cst_5 = arith.constant dense<0.000000e+00> : vector<1x8xf32>
    %12 = tpu.matmul %11, %0, %cst_5 {dimension_numbers = #tpu.dot_dimension_numbers<[1], [1], [0], [0], [0, 0, 1, 0], [], []>} : vector<1x36xf32>, vector<8x36xf32>, vector<1x8xf32> -> vector<1x8xf32>
    %13 = arith.mulf %12, %12 : vector<1x8xf32>
    %14 = vector.shape_cast %13 : vector<1x8xf32> to vector<1x1x8xf32>
    %cst_6 = arith.constant dense<0.000000e+00> : vector<1xf32>
    %15 = vector.multi_reduction <add>, %14, %cst_6 [1, 2] : vector<1x1x8xf32> to vector<1xf32>
    %16 = vector.shape_cast %15 : vector<1xf32> to vector<1x1x1xf32>
    %17 = vector.extract %16[0, 0, 0] : f32 from vector<1x1x1xf32>
    %18 = math.sqrt %17 : f32
    %cst_7 = arith.constant 9.99999996E-13 : f32
    %19 = arith.maximumf %18, %cst_7 : f32
    %20 = vector.broadcast %19 : f32 to vector<1x8xf32>
    %21 = arith.divf %12, %20 : vector<1x8xf32>
    %22 = arith.mulf %21, %12 : vector<1x8xf32>
    %23 = vector.shape_cast %22 : vector<1x8xf32> to vector<1x1x8xf32>
    %cst_8 = arith.constant dense<0.000000e+00> : vector<1xf32>
    %24 = vector.multi_reduction <add>, %23, %cst_8 [1, 2] : vector<1x1x8xf32> to vector<1xf32>
    %25 = vector.shape_cast %24 : vector<1xf32> to vector<1x1x1xf32>
    %26 = vector.extract %25[0, 0, 0] : f32 from vector<1x1x1xf32>
    %c0_9 = arith.constant 0 : index
    %c0_10 = arith.constant 0 : index
    %27 = vector.load %arg2[%c0_9, %c0_10] : memref<1x8xf32, #tpu.memory_space<vmem>>, vector<1x8xf32>
    tpu.vector_store %arg2[%c0_9, %c0_10], %21 {strides = array<i32>} : memref<1x8xf32, #tpu.memory_space<vmem>>, vector<1x8xf32>,
    %c0_11 = arith.constant 0 : index
    %28 = memref.load %arg3[%c0_11] : memref<1xf32, #tpu.memory_space<smem>>
    memref.store %26, %arg3[%c0_11] : memref<1xf32, #tpu.memory_space<smem>>
    return
  }
}

</mosaic_0001>

<llo_original>
// kernel: tpu_custom_call.1
$region0: #{tpu_custom_call.1}
  #allocation0 [shape = 'u32[]', space=smem, size = 0x4, offset = 0x4, fixed_abs, tag = 'smem constant byte address 0x4 - core index']
  #allocation1 [shape = 'u32[144,128]{1,0:T(1,128)}', space=vmem, size = 0x12000, scoped, tag = 'internal scratch']
  %s0 = inlined_call_operand.hbm [shape: f32[8,36], index: 0, kind: input, shape index: {}]
  %s1 = inlined_call_operand.vmem [shape: f32[1,8], index: 1, kind: input, shape index: {}]
  %s2 = inlined_call_operand.hbm [shape: f32[1,8], index: 2, kind: output, shape index: {0}]
  %s3 = inlined_call_operand.hbm [shape: f32[1], index: 3, kind: output, shape index: {1}]
  %4 = xla_tuple %s2, %s3
  %s5 = sld [smem:[#allocation0]]
  $region30: #{tpu_custom_call.1} parent=0
    _
  %s7 = ssub.s32 1, %s5
  %s8 = scalar_select 0, %s7, %s5
  $region1: #{tpu_custom_call.1} parent=0
    #allocation2 [shape = 'u8[4096]{0}', space=vmem, size = 0x1000, scoped, tag = 'input window, operand 0, single buffered']
    #allocation3 [shape = 's32[1]{0}', space=sflag, size = 0x4, scoped, tag = 'scoped memory for tpu_custom_call.1']
    #allocation4 [shape = 's32[1]{0}', space=sflag, size = 0x4, scoped, tag = 'scoped memory for tpu_custom_call.1']
    #allocation5 [shape = 's32[1]{0}', space=sflag, size = 0x4, scoped, tag = 'scoped memory for tpu_custom_call.1']
    #allocation6 [shape = 'u8[512]{0}', space=vmem, size = 0x400, scoped, tag = 'output window, operand 0, single buffered']
    #allocation7 [shape = 'u8[512]{0}', space=smem, size = 0x200, scoped, tag = 'output window, operand 1, single buffered']
    %9 = vsyncpa [#allocation3], 0
    %10 = vsyncpa [#allocation4], 0
    %11 = vsyncpa [#allocation5], 0
    // Predicated region
    $region2: #{tpu_custom_call.1} parent=1 // pred_check
      _
    $region3: #{tpu_custom_call.1} parent=1 // pred_check_branch
      %13 = sbr.rel (0) target = $region5
    $region4: #{tpu_custom_call.1} parent=1 // pred_region
      %s15 = ssub.s32 128, 128
      %16 = vsyncadd [#allocation3], %s15
      %s18 = sshll.u32 [#allocation2], 4
      %s19 = int_to_ptr.vmem [resolvable:$true] %s18
      %21 = dma.hbm_to_vmem [thread:$0]  %s0, 128, %s19, [#allocation3]
    $region5: #{tpu_custom_call.1} parent=1 // pred_fallthru
      _
    // Predicated region
    $region6: #{tpu_custom_call.1} parent=1 // pred_check
      _
    $region7: #{tpu_custom_call.1} parent=1 // pred_check_branch
      %23 = sbr.rel (0) target = $region9
    $region8: #{tpu_custom_call.1} parent=1 // pred_region
      _
    $region9: #{tpu_custom_call.1} parent=1 // pred_fallthru
      _
    // Predicated region
    $region10: #{tpu_custom_call.1} parent=1 // pred_check
      _
    $region11: #{tpu_custom_call.1} parent=1 // pred_check_branch
      %25 = sbr.rel (0) target = $region13
    $region12: #{tpu_custom_call.1} parent=1 // pred_region
      %26 = dma.done [#allocation3], 128
    $region13: #{tpu_custom_call.1} parent=1 // pred_fallthru
      _
    %v27 = vld [vmem:[#allocation2] sm:$0xff]
    %v28 = vld [vmem:[%s1] sm:$0x1]
    %vm29 = vcmask 64512
    %v31 = vsel %vm29, %v28, 0
    %33 = vmatprep.subr.mxu0 0.0
    %34 = vmatpush1.msra.mxu0 0.0
    %35 = vmatprep.subr.mxu0 0.0
    %36 = vmatpush1.msra.mxu0 0.0
    %37 = vmatprep.subr.mxu0 0.0
    %38 = vmatpush1.msra.mxu0 0.0
    %39 = vmatprep.subr.mxu0 0.0
    %40 = vmatpush1.msra.mxu0 0.0
    %41 = vmatprep.subr.mxu0 0.0
    %42 = vmatpush1.msra.mxu0 0.0
    %43 = vmatprep.subr.mxu0 0.0
    %44 = vmatpush1.msra.mxu0 0.0
    %45 = vmatprep.subr.mxu0 0.0
    %46 = vmatpush1.msra.mxu0 0.0
    %47 = vmatprep.subr.mxu0 0.0
    %48 = vmatpush1.msra.mxu0 0.0
    %49 = vmatprep.subr.mxu0 0.0
    %50 = vmatpush1.msra.mxu0 0.0
    %51 = vmatprep.subr.mxu0 0.0
    %52 = vmatpush1.msra.mxu0 0.0
    %53 = vmatprep.subr.mxu0 0.0
    %54 = vmatpush1.msra.mxu0 0.0
    %55 = vmatprep.subr.mxu0 0.0
    %56 = vmatpush1.msra.mxu0 0.0
    %57 = vmatprep.subr.mxu0 0.0
    %58 = vmatpush1.msra.mxu0 0.0
    %59 = vmatprep.subr.mxu0 0.0
    %60 = vmatpush1.msra.mxu0 0.0
    %61 = vmatprep.subr.mxu0 0.0
    %62 = vmatpush1.msra.mxu0 0.0
    %63 = vmatprep.subr.mxu0 0.0
    %64 = vmatpush1.msra.mxu0 %v27
    %65 = vmatprep.subr.mxu0 0.0
    %66 = vmatpush2.msra.mxu0 0.0
    %67 = vmatprep.subr.mxu0 0.0
    %68 = vmatpush2.msra.mxu0 0.0
    %69 = vmatprep.subr.mxu0 0.0
    %70 = vmatpush2.msra.mxu0 0.0
    %71 = vmatprep.subr.mxu0 0.0
    %72 = vmatpush2.msra.mxu0 0.0
    %73 = vmatprep.subr.mxu0 0.0
    %74 = vmatpush2.msra.mxu0 0.0
    %75 = vmatprep.subr.mxu0 0.0
    %76 = vmatpush2.msra.mxu0 0.0
    %77 = vmatprep.subr.mxu0 0.0
    %78 = vmatpush2.msra.mxu0 0.0
    %79 = vmatprep.subr.mxu0 0.0
    %80 = vmatpush2.msra.mxu0 0.0
    %81 = vmatprep.subr.mxu0 0.0
    %82 = vmatpush2.msra.mxu0 0.0
    %83 = vmatprep.subr.mxu0 0.0
    %84 = vmatpush2.msra.mxu0 0.0
    %85 = vmatprep.subr.mxu0 0.0
    %86 = vmatpush2.msra.mxu0 0.0
    %87 = vmatprep.subr.mxu0 0.0
    %88 = vmatpush2.msra.mxu0 0.0
    %89 = vmatprep.subr.mxu0 0.0
    %90 = vmatpush2.msra.mxu0 0.0
    %91 = vmatprep.subr.mxu0 0.0
    %92 = vmatpush2.msra.mxu0 0.0
    %93 = vmatprep.subr.mxu0 0.0
    %94 = vmatpush2.msra.mxu0 0.0
    %95 = vmatprep.subr.mxu0 0.0
    %96 = vmatpush2.msra.mxu0 0.0
    %97 = vmatprep.mubr.f32.mxu0 0.0
    %98 = vmatmul.mubr.f32.gmra.mxu0 %v31
    %v99 = vpop.f32.mrf.mxu0
    %v100 = vadd.f32 0.0, %v99
    %v101 = vpop.f32.mrf.mxu0
    %102 = vdwg.mxu0
    %v103 = vmul.f32 %v100, %v100
    %vm104 = vcmask 286720
    %v105 = vsel %vm104, %v103, 0.0
    %106 = vadd.xlane.f32.xlu0 %v105
    %v107 = vpop.xlane.xlu0 %106
    %v108 = vrot.slane %v107, 4
    %v109 = vadd.f32 %v107, %v108
    %v110 = vrot.slane %v109, 2
    %v111 = vadd.f32 %v109, %v110
    %v112 = vrot.slane %v111, 1
    %v113 = vadd.f32 %v111, %v112
    %s114 = vtos %v113
    %v115 = vstv %s114
    %v116 = vrsqrt.pop %v115
    %v117 = vmul.f32 %v115, %v116
    %vm118 = vcmp.eq.f32.partialorder %v115, inf
    %v119 = vsel %vm118, %v115, %v117
    %vm120 = vcmp.eq.f32.partialorder %v115, 0.0
    %v121 = vand.u32 %v115, 2147483648
    %v122 = vsel %vm120, %v121, %v119
    %s123 = vtos %v122
    %s124 = smax.f32 %s123, 1e-12
    %v125 = vstv %s124
    %v126 = vrcp.pop %v125
    %v127 = vmul.f32 %v100, %v126
    %vm128 = vcmask 293888
    %v130 = vsel %vm128, %v127, 0
    %v133 = vsel %vm128, %v27, 0
    %135 = vmatprep.subr.mxu0 0.0
    %136 = vmatpush1.xpose.msra.mxu0 0.0
    %137 = vmatprep.subr.mxu0 0.0
    %138 = vmatpush1.xpose.msra.mxu0 0.0
    %139 = vmatprep.subr.mxu0 0.0
    %140 = vmatpush1.xpose.msra.mxu0 0.0
    %141 = vmatprep.subr.mxu0 0.0
    %142 = vmatpush1.xpose.msra.mxu0 0.0
    %143 = vmatprep.subr.mxu0 0.0
    %144 = vmatpush1.xpose.msra.mxu0 0.0
    %145 = vmatprep.subr.mxu0 0.0
    %146 = vmatpush1.xpose.msra.mxu0 0.0
    %147 = vmatprep.subr.mxu0 0.0
    %148 = vmatpush1.xpose.msra.mxu0 0.0
    %149 = vmatprep.subr.mxu0 0.0
    %150 = vmatpush1.xpose.msra.mxu0 0.0
    %151 = vmatprep.subr.mxu0 0.0
    %152 = vmatpush1.xpose.msra.mxu0 0.0
    %153 = vmatprep.subr.mxu0 0.0
    %154 = vmatpush1.xpose.msra.mxu0 0.0
    %155 = vmatprep.subr.mxu0 0.0
    %156 = vmatpush1.xpose.msra.mxu0 0.0
    %157 = vmatprep.subr.mxu0 0.0
    %158 = vmatpush1.xpose.msra.mxu0 0.0
    %159 = vmatprep.subr.mxu0 0.0
    %160 = vmatpush1.xpose.msra.mxu0 0.0
    %161 = vmatprep.subr.mxu0 0.0
    %162 = vmatpush1.xpose.msra.mxu0 0.0
    %163 = vmatprep.subr.mxu0 0.0
    %164 = vmatpush1.xpose.msra.mxu0 0.0
    %165 = vmatprep.subr.mxu0 0.0
    %166 = vmatpush1.xpose.msra.mxu0 %v133
    %167 = vmatprep.subr.mxu0 0.0
    %168 = vmatpush2.xpose.msra.mxu0 0.0
    %169 = vmatprep.subr.mxu0 0.0
    %170 = vmatpush2.xpose.msra.mxu0 0.0
    %171 = vmatprep.subr.mxu0 0.0
    %172 = vmatpush2.xpose.msra.mxu0 0.0
    %173 = vmatprep.subr.mxu0 0.0
    %174 = vmatpush2.xpose.msra.mxu0 0.0
    %175 = vmatprep.subr.mxu0 0.0
    %176 = vmatpush2.xpose.msra.mxu0 0.0
    %177 = vmatprep.subr.mxu0 0.0
    %178 = vmatpush2.xpose.msra.mxu0 0.0
    %179 = vmatprep.subr.mxu0 0.0
    %180 = vmatpush2.xpose.msra.mxu0 0.0
    %181 = vmatprep.subr.mxu0 0.0
    %182 = vmatpush2.xpose.msra.mxu0 0.0
    %183 = vmatprep.subr.mxu0 0.0
    %184 = vmatpush2.xpose.msra.mxu0 0.0
    %185 = vmatprep.subr.mxu0 0.0
    %186 = vmatpush2.xpose.msra.mxu0 0.0
    %187 = vmatprep.subr.mxu0 0.0
    %188 = vmatpush2.xpose.msra.mxu0 0.0
    %189 = vmatprep.subr.mxu0 0.0
    %190 = vmatpush2.xpose.msra.mxu0 0.0
    %191 = vmatprep.subr.mxu0 0.0
    %192 = vmatpush2.xpose.msra.mxu0 0.0
    %193 = vmatprep.subr.mxu0 0.0
    %194 = vmatpush2.xpose.msra.mxu0 0.0
    %195 = vmatprep.subr.mxu0 0.0
    %196 = vmatpush2.xpose.msra.mxu0 0.0
    %197 = vmatprep.subr.mxu0 0.0
    %198 = vmatpush2.xpose.msra.mxu0 0.0
    %199 = vmatprep.mubr.f32.mxu0 0.0
    %200 = vmatmul.mubr.f32.gmra.mxu0 %v130
    %v201 = vpop.f32.mrf.mxu0
    %v202 = vadd.f32 0.0, %v201
    %v203 = vpop.f32.mrf.mxu0
    %204 = vdwg.mxu0
    %v205 = vmul.f32 %v202, %v202
    %vm206 = vcmask 57344
    %v207 = vsel %vm206, %v205, 0.0
    %208 = vadd.xlane.f32.xlu0 %v207
    %v209 = vpop.xlane.xlu0 %208
    %v210 = vrot.slane %v209, 4
    %v211 = vadd.f32 %v209, %v210
    %v212 = vrot.slane %v211, 2
    %v213 = vadd.f32 %v211, %v212
    %v214 = vrot.slane %v213, 1
    %v215 = vadd.f32 %v213, %v214
    %s216 = vtos %v215
    %v217 = vstv %s216
    %v218 = vrsqrt.pop %v217
    %v219 = vmul.f32 %v217, %v218
    %vm220 = vcmp.eq.f32.partialorder %v217, inf
    %v221 = vsel %vm220, %v217, %v219
    %vm222 = vcmp.eq.f32.partialorder %v217, 0.0
    %v223 = vand.u32 %v217, 2147483648
    %v224 = vsel %vm222, %v223, %v221
    %s225 = vtos %v224
    %s226 = smax.f32 %s225, 1e-12
    %v227 = vstv %s226
    %v228 = vrcp.pop %v227
    %v229 = vmul.f32 %v202, %v228
    %v230 = vmul.f32 %v229, %v202
    %v231 = vsel %vm206, %v230, 0.0
    %232 = vadd.xlane.f32.xlu0 %v231
    %v233 = vpop.xlane.xlu0 %232
    %v234 = vrot.slane %v233, 4
    %v235 = vadd.f32 %v233, %v234
    %v236 = vrot.slane %v235, 2
    %v237 = vadd.f32 %v235, %v236
    %v238 = vrot.slane %v237, 1
    %v239 = vadd.f32 %v237, %v238
    %s240 = vtos %v239
    %241 = vst.msk [vmem:[#allocation6] sm:$0x1] %vm206, %v229
    %s242 = scalar_lea.smem [#allocation7], 0
    %243 = sst [smem:[%s242]] %s240
    // Predicated region
    $region14: #{tpu_custom_call.1} parent=1 // pred_check
      _
    $region15: #{tpu_custom_call.1} parent=1 // pred_check_branch
      %245 = sbr.rel (0) target = $region17
    $region16: #{tpu_custom_call.1} parent=1 // pred_region
      %s247 = ssub.s32 16, 16
      %248 = vsyncadd [#allocation4], %s247
      %s250 = sshll.u32 [#allocation6], 4
      %s251 = int_to_ptr.vmem [resolvable:$true] %s250
      %253 = dma.vmem_to_hbm [thread:$0]  %s251, 16, %s2, [#allocation4]
    $region17: #{tpu_custom_call.1} parent=1 // pred_fallthru
      _
    // Predicated region
    $region18: #{tpu_custom_call.1} parent=1 // pred_check
      _
    $region19: #{tpu_custom_call.1} parent=1 // pred_check_branch
      %255 = sbr.rel (0) target = $region21
    $region20: #{tpu_custom_call.1} parent=1 // pred_region
      %s257 = ssub.s32 16, 16
      %258 = vsyncadd [#allocation5], %s257
      %261 = dma.smem_to_hbm [#allocation7], 16, %s3, [#allocation5]
    $region21: #{tpu_custom_call.1} parent=1 // pred_fallthru
      _
    // Predicated region
    $region22: #{tpu_custom_call.1} parent=1 // pred_check
      _
    $region23: #{tpu_custom_call.1} parent=1 // pred_check_branch
      %263 = sbr.rel (0) target = $region25
    $region24: #{tpu_custom_call.1} parent=1 // pred_region
      %264 = dma.done [#allocation4], 16
    $region25: #{tpu_custom_call.1} parent=1 // pred_fallthru
      _
    // Predicated region
    $region26: #{tpu_custom_call.1} parent=1 // pred_check
      _
    $region27: #{tpu_custom_call.1} parent=1 // pred_check_branch
      %266 = sbr.rel (0) target = $region29
    $region28: #{tpu_custom_call.1} parent=1 // pred_region
      %267 = dma.done [#allocation5], 16
    $region29: #{tpu_custom_call.1} parent=1 // pred_fallthru
      _
    %268 = sfence
    %269 = vsyncpa [#allocation3], 1
    %270 = vsyncpa [#allocation4], 1
    %271 = vsyncpa [#allocation5], 1

</llo_original>
